<compile_context>
chip_gen: v7x
topology: tpu7x:2x2x1
jax: 0.10.0
libtpu: 0.0.40
codegen_flags: <defaults>
</compile_context>

<pallas_src>
import functools

import jax
import jax.numpy as jnp
from jax import lax
from jax.experimental import pallas as pl
from jax.experimental.pallas import tpu as pltpu


def _round_up(x, m):
    return (x + m - 1) // m * m


def _qnet_kernel(x_ref, w1_ref, b1_ref, w2_ref, b2_ref, w3_ref, b3_ref, o_ref):
    # Cast to bf16 in-kernel (VALU slack) -- avoids a standalone HBM cast pass.
    x = x_ref[...].astype(jnp.bfloat16)                             # (TB, D)

    # Layer 1: (TB, D) @ (D, 128) -> (TB, 128), f32 accumulation on the MXU.
    h1 = jnp.dot(x, w1_ref[...], preferred_element_type=jnp.float32)
    h1 = jnp.maximum(h1 + b1_ref[...], 0.0)                         # bias + ReLU (f32, VPU)

    # Layer 2: (TB, 128) @ (128, 64) -> (TB, 64).
    h2 = jnp.dot(h1.astype(jnp.bfloat16), w2_ref[...],
                 preferred_element_type=jnp.float32)
    h2 = jnp.maximum(h2 + b2_ref[...], 0.0)                         # (TB, 64) f32

    # Layer 3 computed as W3 @ h2^T so Q values land on the lane axis:
    #   (16, 64) . (TB, 64)^T -> (16, TB); only row 0 is meaningful.
    # bf16 operands -> single-pass MXU matmul, half the transposed vregs.
    qt = lax.dot_general(w3_ref[...], h2.astype(jnp.bfloat16),
                         dimension_numbers=(((1,), (1,)), ((), ())),
                         preferred_element_type=jnp.float32)        # (16, TB)

    o_ref[...] = qt[0:1, :] + b3_ref[0]                             # (1, TB) lane-dense store


def qnet_forward(feature_and_action, params, *, tile_b=8192):
    """feature_and_action: [B, feature_dim + act_dim] (f32).
    params: (w1[D,128] bf16, b1[1,128] f32, w2[128,64] bf16, b2[1,64] f32,
             w3p[16,64] bf16 (row 0 = real weights), b3[1] f32).
    Returns Q values of shape [B, 1] in f32.  Wrap in jax.jit so any pad fuses."""
    w1, b1, w2, b2, w3p, b3 = params
    B, D = feature_and_action.shape
    hidden1 = w1.shape[1]
    hidden2 = w2.shape[1]

    # Batch tile: multiple of 128, capped at tile_b; keep >= 2 grid steps when the
    # batch allows so both v7x TensorCores get work.
    tb = _round_up(min(tile_b, max(B, 1)), 128)
    if B > 128:
        tb = min(tb, _round_up(pl.cdiv(B, 2), 128))
    b_pad = _round_up(B, tb)

    x = feature_and_action
    if b_pad != B:
        x = jnp.pad(x, ((0, b_pad - B), (0, 0)))

    grid = (b_pad // tb,)

    flops = 2 * b_pad * (D * hidden1 + hidden1 * hidden2 + hidden2 * 1)
    bytes_accessed = (b_pad * D * 4                                  # x (f32)
                      + int(w1.size) * 2 + int(w2.size) * 2 + int(w3p.size) * 2
                      + (int(b1.size) + int(b2.size) + int(b3.size)) * 4
                      + b_pad * 4)                                   # output

    # VMEM footprint (double-buffered x/out + f32/bf16 intermediates + weights),
    # with headroom; capped at 64 MiB so the limit is valid on v7x (64 MiB physical).
    vmem_est = (2 * tb * D * 4                       # x tile, double-buffered
                + 2 * 8 * tb * 4                     # out tile (padded sublanes), dbl-buf
                + tb * hidden1 * (4 + 2)             # h1 f32 + bf16 copy
                + tb * hidden2 * (4 + 2)             # h2 f32 + bf16 copy
                + 16 * tb * 4                        # qt
                + D * hidden1 * 2 + hidden1 * hidden2 * 2 + 16 * hidden2 * 2
                + (hidden1 + hidden2) * 4)
    vmem_limit = min(64 * 1024 * 1024, max(32 * 1024 * 1024, int(vmem_est * 1.5)))

    out = pl.pallas_call(
        _qnet_kernel,
        out_shape=jax.ShapeDtypeStruct((1, b_pad), jnp.float32),
        grid=grid,
        in_specs=[
            pl.BlockSpec((tb, D), lambda i: (i, 0)),             # x: streamed per batch tile
            pl.BlockSpec((D, hidden1), lambda i: (0, 0)),        # W1: resident
            pl.BlockSpec((1, hidden1), lambda i: (0, 0)),        # b1
            pl.BlockSpec((hidden1, hidden2), lambda i: (0, 0)),  # W2
            pl.BlockSpec((1, hidden2), lambda i: (0, 0)),        # b2
            pl.BlockSpec((16, hidden2), lambda i: (0, 0)),       # W3 (padded to 16 rows, bf16)
            pl.BlockSpec(memory_space=pltpu.MemorySpace.SMEM),   # b3 scalar in SMEM
        ],
        out_specs=pl.BlockSpec((1, tb), lambda i: (0, i)),       # lane-dense Q slab
        compiler_params=pltpu.CompilerParams(
            dimension_semantics=("parallel",),
            vmem_limit_bytes=vmem_limit),
        cost_estimate=pl.CostEstimate(
            flops=flops, transcendentals=0, bytes_accessed=bytes_accessed),
    )(x, w1, b1, w2, b2, w3p, b3)

    return out.reshape(b_pad, 1)[:B]


def _torch_linear_init(key, fan_in, fan_out):
    """nn.Linear default init: U(-1/sqrt(fan_in), 1/sqrt(fan_in)); weight stored [in, out]."""
    kw, kb = jax.random.split(key)
    bound = 1.0 / jnp.sqrt(jnp.float32(fan_in))
    w = jax.random.uniform(kw, (fan_in, fan_out), jnp.float32, -bound, bound)
    b = jax.random.uniform(kb, (1, fan_out), jnp.float32, -bound, bound)
    return w, b


def init_qnet_params(key, feature_dim, act_dim):
    in_dim = feature_dim + act_dim
    k1, k2, k3 = jax.random.split(key, 3)
    w1, b1 = _torch_linear_init(k1, in_dim, 128)
    w2, b2 = _torch_linear_init(k2, 128, 64)
    w3, b3 = _torch_linear_init(k3, 64, 1)
    # Pack layer-3 weight into a (16, 64) bf16 block (row 0 = real weights) so the final
    # matmul has a bf16-sublane-aligned LHS and yields a lane-dense (16, TB) result.
    w3p = jnp.zeros((16, 64), jnp.float32).at[0].set(w3[:, 0])
    return (w1.astype(jnp.bfloat16), b1,
            w2.astype(jnp.bfloat16), b2,
            w3p.astype(jnp.bfloat16), b3.reshape(1))


if __name__ == "__main__":
    # Small demo shapes consistent with QNet: feature_dim=56, act_dim=8 -> D=64, batch=300.
    feature_dim, act_dim = 56, 8
    in_dim = feature_dim + act_dim
    batch = 300

    key = jax.random.PRNGKey(0)
    k_x, k_p = jax.random.split(key)
    feature_and_action = jax.random.normal(k_x, (batch, in_dim), jnp.float32)
    params = init_qnet_params(k_p, feature_dim, act_dim)

    # jit the wrapper so the batch pad fuses into a single pass before the kernel.
    # With B=300 the tile caps at 256 -> grid=(2,), exercising a multi-step grid
    # (and both TensorCores on v7x).
    qnet_jit = jax.jit(functools.partial(qnet_forward, tile_b=8192))
    out = qnet_jit(feature_and_action, params)
    out = jax.block_until_ready(out)

    # Pure-JAX reference mirroring the kernel's bf16-operand / f32-accumulate math.
    w1, b1, w2, b2, w3p, b3 = params
    xb = feature_and_action.astype(jnp.bfloat16).astype(jnp.float32)
    h1 = jnp.maximum(xb @ w1.astype(jnp.float32) + b1, 0.0)
    h2 = jnp.maximum(h1.astype(jnp.bfloat16).astype(jnp.float32)
                     @ w2.astype(jnp.float32) + b2, 0.0)
    h2b = h2.astype(jnp.bfloat16).astype(jnp.float32)
    ref = h2b @ w3p[0:1, :].astype(jnp.float32).T + b3[0]            # (B, 1)

    assert out.shape == (batch, 1)
    assert jnp.allclose(out, ref, atol=3e-3, rtol=3e-3)

    print("KERNEL_OK")
</pallas_src>

<mosaic_0001>
module attributes {stable_mosaic.version = 11 : i64} {
  func.func @_qnet_kernel(%arg0: i32, %arg1: memref<256x64xf32, #tpu.memory_space<vmem>>, %arg2: memref<64x128xbf16, #tpu.memory_space<vmem>>, %arg3: memref<1x128xf32, #tpu.memory_space<vmem>>, %arg4: memref<128x64xbf16, #tpu.memory_space<vmem>>, %arg5: memref<1x64xf32, #tpu.memory_space<vmem>>, %arg6: memref<16x64xbf16, #tpu.memory_space<vmem>>, %arg7: memref<1xf32, #tpu.memory_space<smem>>, %arg8: memref<1x256xf32, #tpu.memory_space<vmem>>) attributes {dimension_semantics = [#tpu.dimension_semantics<parallel>], iteration_bounds = array<i64: 2>, scalar_prefetch = 0 : i64, scratch_operands = 0 : i64, tpu.core_type = #tpu.core_type<tc>, window_params = [{transform_indices = @transform_0, window_bounds = array<i64: 256, 64>}, {pipeline_mode = #tpu.pipeline_mode<synchronous>, transform_indices = @transform_1, window_bounds = array<i64: 64, 128>}, {pipeline_mode = #tpu.pipeline_mode<synchronous>, transform_indices = @transform_2, window_bounds = array<i64: 1, 128>}, {pipeline_mode = #tpu.pipeline_mode<synchronous>, transform_indices = @transform_3, window_bounds = array<i64: 128, 64>}, {pipeline_mode = #tpu.pipeline_mode<synchronous>, transform_indices = @transform_4, window_bounds = array<i64: 1, 64>}, {pipeline_mode = #tpu.pipeline_mode<synchronous>, transform_indices = @transform_5, window_bounds = array<i64: 16, 64>}, {transform_indices = @transform_6, window_bounds = array<i64: 1>}, {transform_indices = @transform_7, window_bounds = array<i64: 1, 256>}]} {
    %c0 = arith.constant 0 : index
    %c0_0 = arith.constant 0 : index
    %0 = vector.load %arg1[%c0, %c0_0] : memref<256x64xf32, #tpu.memory_space<vmem>>, vector<256x64xf32>
    %1 = arith.truncf %0 : vector<256x64xf32> to vector<256x64xbf16>
    %c0_1 = arith.constant 0 : index
    %c0_2 = arith.constant 0 : index
    %2 = vector.load %arg2[%c0_1, %c0_2] : memref<64x128xbf16, #tpu.memory_space<vmem>>, vector<64x128xbf16>
    %cst = arith.constant dense<0.000000e+00> : vector<256x128xf32>
    %3 = tpu.matmul %1, %2, %cst {dimension_numbers = #tpu.dot_dimension_numbers<[1], [0], [0], [1], [0, 0, 1, 1], [], []>} : vector<256x64xbf16>, vector<64x128xbf16>, vector<256x128xf32> -> vector<256x128xf32>
    %c0_3 = arith.constant 0 : index
    %c0_4 = arith.constant 0 : index
    %4 = vector.load %arg3[%c0_3, %c0_4] : memref<1x128xf32, #tpu.memory_space<vmem>>, vector<1x128xf32>
    %5 = vector.broadcast %4 : vector<1x128xf32> to vector<256x128xf32>
    %6 = arith.addf %3, %5 : vector<256x128xf32>
    %cst_5 = arith.constant 0.000000e+00 : f32
    %7 = vector.broadcast %cst_5 : f32 to vector<256x128xf32>
    %8 = arith.maximumf %6, %7 : vector<256x128xf32>
    %9 = arith.truncf %8 : vector<256x128xf32> to vector<256x128xbf16>
    %c0_6 = arith.constant 0 : index
    %c0_7 = arith.constant 0 : index
    %10 = vector.load %arg4[%c0_6, %c0_7] : memref<128x64xbf16, #tpu.memory_space<vmem>>, vector<128x64xbf16>
    %cst_8 = arith.constant dense<0.000000e+00> : vector<256x64xf32>
    %11 = tpu.matmul %9, %10, %cst_8 {dimension_numbers = #tpu.dot_dimension_numbers<[1], [0], [0], [1], [0, 0, 1, 1], [], []>} : vector<256x128xbf16>, vector<128x64xbf16>, vector<256x64xf32> -> vector<256x64xf32>
    %c0_9 = arith.constant 0 : index
    %c0_10 = arith.constant 0 : index
    %12 = vector.load %arg5[%c0_9, %c0_10] : memref<1x64xf32, #tpu.memory_space<vmem>>, vector<1x64xf32>
    %13 = vector.broadcast %12 : vector<1x64xf32> to vector<256x64xf32>
    %14 = arith.addf %11, %13 : vector<256x64xf32>
    %cst_11 = arith.constant 0.000000e+00 : f32
    %15 = vector.broadcast %cst_11 : f32 to vector<256x64xf32>
    %16 = arith.maximumf %14, %15 : vector<256x64xf32>
    %c0_12 = arith.constant 0 : index
    %c0_13 = arith.constant 0 : index
    %17 = vector.load %arg6[%c0_12, %c0_13] : memref<16x64xbf16, #tpu.memory_space<vmem>>, vector<16x64xbf16>
    %18 = arith.truncf %16 : vector<256x64xf32> to vector<256x64xbf16>
    %cst_14 = arith.constant dense<0.000000e+00> : vector<16x256xf32>
    %19 = tpu.matmul %17, %18, %cst_14 {dimension_numbers = #tpu.dot_dimension_numbers<[1], [1], [0], [0], [0, 0, 1, 0], [], []>} : vector<16x64xbf16>, vector<256x64xbf16>, vector<16x256xf32> -> vector<16x256xf32>
    %20 = vector.extract_strided_slice %19 {offsets = [0, 0], sizes = [1, 256], strides = [1, 1]} : vector<16x256xf32> to vector<1x256xf32>
    %c0_15 = arith.constant 0 : index
    %21 = memref.load %arg7[%c0_15] : memref<1xf32, #tpu.memory_space<smem>>
    %22 = vector.broadcast %21 : f32 to vector<1x256xf32>
    %23 = arith.addf %20, %22 : vector<1x256xf32>
    %c0_16 = arith.constant 0 : index
    %c0_17 = arith.constant 0 : index
    %24 = vector.load %arg8[%c0_16, %c0_17] : memref<1x256xf32, #tpu.memory_space<vmem>>, vector<1x256xf32>
    tpu.vector_store %arg8[%c0_16, %c0_17], %23 {strides = array<i32>} : memref<1x256xf32, #tpu.memory_space<vmem>>, vector<1x256xf32>,
    return
  }
  func.func @transform_0(%arg0: i32) -> (i32, i32) {
    %c0_i32 = arith.constant 0 : i32
    %c0_i32_0 = arith.constant 0 : i32
    return %arg0, %c0_i32 : i32, i32
  }
  func.func @transform_1(%arg0: i32) -> (i32, i32) {
    %c0_i32 = arith.constant 0 : i32
    %c0_i32_0 = arith.constant 0 : i32
    %c0_i32_1 = arith.constant 0 : i32
    return %c0_i32, %c0_i32_0 : i32, i32
  }
  func.func @transform_2(%arg0: i32) -> (i32, i32) {
    %c0_i32 = arith.constant 0 : i32
    %c0_i32_0 = arith.constant 0 : i32
    %c0_i32_1 = arith.constant 0 : i32
    return %c0_i32, %c0_i32_0 : i32, i32
  }
  func.func @transform_3(%arg0: i32) -> (i32, i32) {
    %c0_i32 = arith.constant 0 : i32
    %c0_i32_0 = arith.constant 0 : i32
    %c0_i32_1 = arith.constant 0 : i32
    return %c0_i32, %c0_i32_0 : i32, i32
  }
  func.func @transform_4(%arg0: i32) -> (i32, i32) {
    %c0_i32 = arith.constant 0 : i32
    %c0_i32_0 = arith.constant 0 : i32
    %c0_i32_1 = arith.constant 0 : i32
    return %c0_i32, %c0_i32_0 : i32, i32
  }
  func.func @transform_5(%arg0: i32) -> (i32, i32) {
    %c0_i32 = arith.constant 0 : i32
    %c0_i32_0 = arith.constant 0 : i32
    %c0_i32_1 = arith.constant 0 : i32
    return %c0_i32, %c0_i32_0 : i32, i32
  }
  func.func @transform_6(%arg0: i32) -> i32 {
    %c0_i32 = arith.constant 0 : i32
    %c0_i32_0 = arith.constant 0 : i32
    return %c0_i32 : i32
  }
  func.func @transform_7(%arg0: i32) -> (i32, i32) {
    %c0_i32 = arith.constant 0 : i32
    %c0_i32_0 = arith.constant 0 : i32
    return %c0_i32, %arg0 : i32, i32
  }
}

</mosaic_0001>

<llo_original>
// kernel: qnet_forward.1
$region0: #{qnet_forward.1}
  #allocation0 [shape = 'u32[]', space=smem, size = 0x4, offset = 0x4, fixed_abs, tag = 'smem constant byte address 0x4 - core index']
  #allocation1 [shape = 'u32[144,128]{1,0:T(1,128)}', space=vmem, size = 0x12000, scoped, tag = 'internal scratch']
  #allocation2 [shape = 'f32[1]{0:T(128)S(6)}', space=smem, size = 0x200, scoped, tag = 'scoped memory for qnet_forward.1']
  %s0 = inlined_call_operand.vmem [shape: f32[512,64], index: 0, kind: input, shape index: {}]
  %s1 = inlined_call_operand.vmem [shape: bf16[64,128], index: 1, kind: input, shape index: {}]
  %s2 = inlined_call_operand.vmem [shape: f32[1,128], index: 2, kind: input, shape index: {}]
  %s3 = inlined_call_operand.vmem [shape: bf16[128,64], index: 3, kind: input, shape index: {}]
  %s4 = inlined_call_operand.vmem [shape: f32[1,64], index: 4, kind: input, shape index: {}]
  %s5 = inlined_call_operand.vmem [shape: bf16[16,64], index: 5, kind: input, shape index: {}]
  %s6 = inlined_call_operand.<no memory space> [shape: f32[1], index: 6, kind: input, shape index: {}]
  %s7 = inlined_call_operand.vmem [shape: f32[1,512], index: 7, kind: output, shape index: {}]
  %s8 = sld [smem:[#allocation0]]
  $region61: #{qnet_forward.1} parent=0
    _
  %s10 = ssub.s32 1, %s8
  %s11 = scalar_select 0, %s10, %s8
  %12 = sst [smem:[#allocation2]] %s6
  loop: start=0, step=1, limit=4
  $region2: #{qnet_forward.1} parent=0 // loop_pre_header
    _
  $region3: #{qnet_forward.1} parent=0 // loop_header
    %s14 = sphi 0, %s18
    %p15 = scmp.ge.s32.totalorder %s14, 4
    %s24 = sphi 0, %s26
    %s27 = sphi 0, %s24
    %s28 = sphi 0, %s27
    %s44 = sphi 0, %s28
    %s48 = sphi 0, %s48
    %s50 = sphi 0, %s48
    %s51 = sphi 0, %s50
    %s65 = sphi 0, %s51
    %s69 = sphi 0, %s69
    %s71 = sphi 0, %s69
    %s72 = sphi 0, %s71
    %s86 = sphi 0, %s72
    %s90 = sphi 0, %s90
    %s92 = sphi 0, %s90
    %s93 = sphi 0, %s92
    %s107 = sphi 0, %s93
    %s111 = sphi 0, %s111
    %s113 = sphi 0, %s111
    %s114 = sphi 0, %s113
    %s128 = sphi 0, %s114
    %s132 = sphi 0, %s132
    %s134 = sphi 0, %s132
    %s135 = sphi 0, %s134
    %s149 = sphi 0, %s135
    %s153 = sphi 0, %s153
    %s155 = sphi 0, %s153
    %s156 = sphi 0, %s155
    %s170 = sphi 0, %s156
    %s176 = sphi 0, %s178
    %s179 = sphi 0, %s176
    %s180 = sphi 0, %s179
    %s196 = sphi 0, %s180
  $region4: #{qnet_forward.1} parent=0 // loop_header_branch
    %17 = sbr.rel (%p15) target = $region8
  $region5: #{qnet_forward.1} parent=0 // loop_body
    %s19 = ssub.s32 %s14, 1
    %s20 = ssub.s32 %s14, 2
    %s21 = sadd.s32 %s14, 1
    %s22 = ssub.s32 %s14, %s21
    %p23 = scmp.eq.s32.totalorder %s22, 0
    %s25 = sadd.s32 %s24, 1
    %s26 = scalar_select %p23, %s24, %s25
    %p29 = pneg %p23
    %p30 = scmp.eq.s32.totalorder %s14, 1
    %p31 = por %p29, %p30
    %p32 = scmp.ne.s32.totalorder %s24, %s27
    %p33 = scmp.eq.s32.totalorder %s14, 0
    %p34 = por %p32, %p33
    %p35 = scmp.ne.s32.totalorder %s24, %s27
    %p36 = scmp.eq.s32.totalorder %s19, 1
    %p37 = por %p35, %p36
    %p38 = scmp.ne.s32.totalorder %s27, %s28
    %p39 = scmp.eq.s32.totalorder %s19, 0
    %p40 = por %p38, %p39
    %p41 = scmp.ne.s32.totalorder %s27, %s28
    %p42 = scmp.eq.s32.totalorder %s20, 1
    %p43 = por %p41, %p42
    %p45 = scmp.ne.s32.totalorder %s28, %s44
    %p46 = scmp.eq.s32.totalorder %s20, 0
    %p47 = por %p45, %p46
    %s49 = sadd.s32 %s48, 1
    %p52 = scmp.eq.s32.totalorder %s14, 1
    %p53 = scmp.ne.s32.totalorder %s48, %s50
    %p54 = scmp.eq.s32.totalorder %s14, 0
    %p55 = por %p53, %p54
    %p56 = scmp.ne.s32.totalorder %s48, %s50
    %p57 = scmp.eq.s32.totalorder %s19, 1
    %p58 = por %p56, %p57
    %p59 = scmp.ne.s32.totalorder %s50, %s51
    %p60 = scmp.eq.s32.totalorder %s19, 0
    %p61 = por %p59, %p60
    %p62 = scmp.ne.s32.totalorder %s50, %s51
    %p63 = scmp.eq.s32.totalorder %s20, 1
    %p64 = por %p62, %p63
    %p66 = scmp.ne.s32.totalorder %s51, %s65
    %p67 = scmp.eq.s32.totalorder %s20, 0
    %p68 = por %p66, %p67
    %s70 = sadd.s32 %s69, 1
    %p73 = scmp.eq.s32.totalorder %s14, 1
    %p74 = scmp.ne.s32.totalorder %s69, %s71
    %p75 = scmp.eq.s32.totalorder %s14, 0
    %p76 = por %p74, %p75
    %p77 = scmp.ne.s32.totalorder %s69, %s71
    %p78 = scmp.eq.s32.totalorder %s19, 1
    %p79 = por %p77, %p78
    %p80 = scmp.ne.s32.totalorder %s71, %s72
    %p81 = scmp.eq.s32.totalorder %s19, 0
    %p82 = por %p80, %p81
    %p83 = scmp.ne.s32.totalorder %s71, %s72
    %p84 = scmp.eq.s32.totalorder %s20, 1
    %p85 = por %p83, %p84
    %p87 = scmp.ne.s32.totalorder %s72, %s86
    %p88 = scmp.eq.s32.totalorder %s20, 0
    %p89 = por %p87, %p88
    %s91 = sadd.s32 %s90, 1
    %p94 = scmp.eq.s32.totalorder %s14, 1
    %p95 = scmp.ne.s32.totalorder %s90, %s92
    %p96 = scmp.eq.s32.totalorder %s14, 0
    %p97 = por %p95, %p96
    %p98 = scmp.ne.s32.totalorder %s90, %s92
    %p99 = scmp.eq.s32.totalorder %s19, 1
    %p100 = por %p98, %p99
    %p101 = scmp.ne.s32.totalorder %s92, %s93
    %p102 = scmp.eq.s32.totalorder %s19, 0
    %p103 = por %p101, %p102
    %p104 = scmp.ne.s32.totalorder %s92, %s93
    %p105 = scmp.eq.s32.totalorder %s20, 1
    %p106 = por %p104, %p105
    %p108 = scmp.ne.s32.totalorder %s93, %s107
    %p109 = scmp.eq.s32.totalorder %s20, 0
    %p110 = por %p108, %p109
    %s112 = sadd.s32 %s111, 1
    %p115 = scmp.eq.s32.totalorder %s14, 1
    %p116 = scmp.ne.s32.totalorder %s111, %s113
    %p117 = scmp.eq.s32.totalorder %s14, 0
    %p118 = por %p116, %p117
    %p119 = scmp.ne.s32.totalorder %s111, %s113
    %p120 = scmp.eq.s32.totalorder %s19, 1
    %p121 = por %p119, %p120
    %p122 = scmp.ne.s32.totalorder %s113, %s114
    %p123 = scmp.eq.s32.totalorder %s19, 0
    %p124 = por %p122, %p123
    %p125 = scmp.ne.s32.totalorder %s113, %s114
    %p126 = scmp.eq.s32.totalorder %s20, 1
    %p127 = por %p125, %p126
    %p129 = scmp.ne.s32.totalorder %s114, %s128
    %p130 = scmp.eq.s32.totalorder %s20, 0
    %p131 = por %p129, %p130
    %s133 = sadd.s32 %s132, 1
    %p136 = scmp.eq.s32.totalorder %s14, 1
    %p137 = scmp.ne.s32.totalorder %s132, %s134
    %p138 = scmp.eq.s32.totalorder %s14, 0
    %p139 = por %p137, %p138
    %p140 = scmp.ne.s32.totalorder %s132, %s134
    %p141 = scmp.eq.s32.totalorder %s19, 1
    %p142 = por %p140, %p141
    %p143 = scmp.ne.s32.totalorder %s134, %s135
    %p144 = scmp.eq.s32.totalorder %s19, 0
    %p145 = por %p143, %p144
    %p146 = scmp.ne.s32.totalorder %s134, %s135
    %p147 = scmp.eq.s32.totalorder %s20, 1
    %p148 = por %p146, %p147
    %p150 = scmp.ne.s32.totalorder %s135, %s149
    %p151 = scmp.eq.s32.totalorder %s20, 0
    %p152 = por %p150, %p151
    %s154 = sadd.s32 %s153, 1
    %p157 = scmp.eq.s32.totalorder %s14, 1
    %p158 = scmp.ne.s32.totalorder %s153, %s155
    %p159 = scmp.eq.s32.totalorder %s14, 0
    %p160 = por %p158, %p159
    %p161 = scmp.ne.s32.totalorder %s153, %s155
    %p162 = scmp.eq.s32.totalorder %s19, 1
    %p163 = por %p161, %p162
    %p164 = scmp.ne.s32.totalorder %s155, %s156
    %p165 = scmp.eq.s32.totalorder %s19, 0
    %p166 = por %p164, %p165
    %p167 = scmp.ne.s32.totalorder %s155, %s156
    %p168 = scmp.eq.s32.totalorder %s20, 1
    %p169 = por %p167, %p168
    %p171 = scmp.ne.s32.totalorder %s156, %s170
    %p172 = scmp.eq.s32.totalorder %s20, 0
    %p173 = por %p171, %p172
    %s174 = ssub.s32 %s14, %s21
    %p175 = scmp.eq.s32.totalorder %s174, 0
    %s177 = sadd.s32 %s176, 1
    %s178 = scalar_select %p175, %s176, %s177
    %p181 = pneg %p175
    %p182 = scmp.eq.s32.totalorder %s14, 1
    %p183 = por %p181, %p182
    %p184 = scmp.ne.s32.totalorder %s176, %s179
    %p185 = scmp.eq.s32.totalorder %s14, 0
    %p186 = por %p184, %p185
    %p187 = scmp.ne.s32.totalorder %s176, %s179
    %p188 = scmp.eq.s32.totalorder %s19, 1
    %p189 = por %p187, %p188
    %p190 = scmp.ne.s32.totalorder %s179, %s180
    %p191 = scmp.eq.s32.totalorder %s19, 0
    %p192 = por %p190, %p191
    %p193 = scmp.ne.s32.totalorder %s179, %s180
    %p194 = scmp.eq.s32.totalorder %s20, 1
    %p195 = por %p193, %p194
    %p197 = scmp.ne.s32.totalorder %s180, %s196
    %p198 = scmp.eq.s32.totalorder %s20, 0
    %p199 = por %p197, %p198
    %p200 = scmp.le.s32.totalorder 1, %s14
    %p201 = scmp.lt.s32.totalorder %s14, 3
    %p202 = pnand %p200, %p201
    %p203 = pneg %p202
    // Predicated region
    $region9: #{qnet_forward.1} parent=5 // pred_check
      _
    $region10: #{qnet_forward.1} parent=5 // pred_check_branch
      %205 = sbr.rel (%p202) target = $region12
    $region11: #{qnet_forward.1} parent=5 // pred_region
      %s206 = ssub.s32 %s14, 1
      // Predicated region
      $region13: #{qnet_forward.1} parent=11 // pred_check
        %p207 = pneg %p61
      $region14: #{qnet_forward.1} parent=11 // pred_check_branch
        %209 = sbr.rel (%p207) target = $region16
      $region15: #{qnet_forward.1} parent=11 // pred_region
        _
      $region16: #{qnet_forward.1} parent=11 // pred_fallthru
        _
      // Predicated region
      $region17: #{qnet_forward.1} parent=11 // pred_check
        %p210 = pneg %p82
      $region18: #{qnet_forward.1} parent=11 // pred_check_branch
        %212 = sbr.rel (%p210) target = $region20
      $region19: #{qnet_forward.1} parent=11 // pred_region
        _
      $region20: #{qnet_forward.1} parent=11 // pred_fallthru
        _
      // Predicated region
      $region21: #{qnet_forward.1} parent=11 // pred_check
        %p213 = pneg %p103
      $region22: #{qnet_forward.1} parent=11 // pred_check_branch
        %215 = sbr.rel (%p213) target = $region24
      $region23: #{qnet_forward.1} parent=11 // pred_region
        _
      $region24: #{qnet_forward.1} parent=11 // pred_fallthru
        _
      // Predicated region
      $region25: #{qnet_forward.1} parent=11 // pred_check
        %p216 = pneg %p124
      $region26: #{qnet_forward.1} parent=11 // pred_check_branch
        %218 = sbr.rel (%p216) target = $region28
      $region27: #{qnet_forward.1} parent=11 // pred_region
        _
      $region28: #{qnet_forward.1} parent=11 // pred_fallthru
        _
      // Predicated region
      $region29: #{qnet_forward.1} parent=11 // pred_check
        %p219 = pneg %p145
      $region30: #{qnet_forward.1} parent=11 // pred_check_branch
        %221 = sbr.rel (%p219) target = $region32
      $region31: #{qnet_forward.1} parent=11 // pred_region
        _
      $region32: #{qnet_forward.1} parent=11 // pred_fallthru
        _
      // Predicated region
      $region33: #{qnet_forward.1} parent=11 // pred_check
        %p222 = pneg %p166
      $region34: #{qnet_forward.1} parent=11 // pred_check_branch
        %224 = sbr.rel (%p222) target = $region36
      $region35: #{qnet_forward.1} parent=11 // pred_region
        _
      $region36: #{qnet_forward.1} parent=11 // pred_fallthru
        _
    $region12: #{qnet_forward.1} parent=5 // pred_fallthru
      _
    %p225 = scmp.lt.s32.totalorder %s14, 2
    // Predicated region
    $region37: #{qnet_forward.1} parent=5 // pred_check
      %p226 = pneg %p225
    $region38: #{qnet_forward.1} parent=5 // pred_check_branch
      %228 = sbr.rel (%p226) target = $region40
    $region39: #{qnet_forward.1} parent=5 // pred_region
      // Predicated region
      $region41: #{qnet_forward.1} parent=39 // pred_check
        %p229 = pneg %p34
      $region42: #{qnet_forward.1} parent=39 // pred_check_branch
        %231 = sbr.rel (%p229) target = $region44
      $region43: #{qnet_forward.1} parent=39 // pred_region
        %s232 = smul.u32 32, %s14
        %p233 = scmp.lt.s32.totalorder %s232, 63
        %s234 = scalar_select %p233, %s232, 63
        %s235 = smul.addr %s234, 8
        %s236 = scalar_lea.vmem %s0, %s235
        %s237 = smul.u32 32, %s14
      $region44: #{qnet_forward.1} parent=39 // pred_fallthru
        _
    $region40: #{qnet_forward.1} parent=5 // pred_fallthru
      _
    %p238 = scmp.le.s32.totalorder 1, %s14
    %p239 = scmp.lt.s32.totalorder %s14, 3
    %p240 = pnand %p238, %p239
    %p241 = pneg %p240
    // Predicated region
    $region45: #{qnet_forward.1} parent=5 // pred_check
      _
    $region46: #{qnet_forward.1} parent=5 // pred_check_branch
      %243 = sbr.rel (%p240) target = $region48
    $region47: #{qnet_forward.1} parent=5 // pred_region
      %s244 = ssub.s32 %s14, 1
      %s245 = smul.u32 32, %s19
      %p246 = scmp.lt.s32.totalorder %s245, 63
      %s247 = scalar_select %p246, %s245, 63
      %s248 = smul.addr %s247, 8
      %s249 = scalar_lea.vmem %s0, %s248
      %p250 = pneg %p40
      %p251 = pneg %p37
      %p252 = pneg %p61
      %p253 = pneg %p58
      %p254 = pneg %p82
      %p255 = pneg %p79
      %p256 = pneg %p103
      %p257 = pneg %p100
      %p258 = pneg %p124
      %p259 = pneg %p121
      %p260 = pneg %p145
      %p261 = pneg %p142
      %p262 = pneg %p166
      %p263 = pneg %p163
      %p264 = pneg %p192
      %p265 = pneg %p189
      %s266 = smul.u32 2, %s19
      %p267 = scmp.lt.s32.totalorder %s266, 3
      %s268 = scalar_select %p267, %s266, 3
      %s269 = scalar_lea.vmem %s7, %s268
      %s270 = smul.u32 32, %s19
      %p271 = scmp.lt.s32.totalorder %s270, 63
      %s272 = scalar_select %p271, %s270, 63
      %s273 = smul.addr %s272, 8
      %s274 = scalar_lea.vmem %s0, %s273
      %s275 = smul.u32 32, %s19
      %s276 = smul.u32 2, %s19
      %p277 = scmp.lt.s32.totalorder %s276, 3
      %s278 = scalar_select %p277, %s276, 3
      %s279 = scalar_lea.vmem %s7, %s278
      %s280 = smul.u32 2, %s19
      %v282 = vld [vmem:[%s274] sm:$0xff]
      %v283 = vld [vmem:[%s274 + $0x8] sm:$0xff]
      %v284 = vld [vmem:[%s274 + $0x10] sm:$0xff]
      %v285 = vld [vmem:[%s274 + $0x18] sm:$0xff]
      %v286 = vld [vmem:[%s274 + $0x20] sm:$0xff]
      %v287 = vld [vmem:[%s274 + $0x28] sm:$0xff]
      %v288 = vld [vmem:[%s274 + $0x30] sm:$0xff]
      %v289 = vld [vmem:[%s274 + $0x38] sm:$0xff]
      %v290 = vld [vmem:[%s274 + $0x40] sm:$0xff]
      %v291 = vld [vmem:[%s274 + $0x48] sm:$0xff]
      %v292 = vld [vmem:[%s274 + $0x50] sm:$0xff]
      %v293 = vld [vmem:[%s274 + $0x58] sm:$0xff]
      %v294 = vld [vmem:[%s274 + $0x60] sm:$0xff]
      %v295 = vld [vmem:[%s274 + $0x68] sm:$0xff]
      %v296 = vld [vmem:[%s274 + $0x70] sm:$0xff]
      %v297 = vld [vmem:[%s274 + $0x78] sm:$0xff]
      %v298 = vld [vmem:[%s274 + $0x80] sm:$0xff]
      %v299 = vld [vmem:[%s274 + $0x88] sm:$0xff]
      %v300 = vld [vmem:[%s274 + $0x90] sm:$0xff]
      %v301 = vld [vmem:[%s274 + $0x98] sm:$0xff]
      %v302 = vld [vmem:[%s274 + $0xa0] sm:$0xff]
      %v303 = vld [vmem:[%s274 + $0xa8] sm:$0xff]
      %v304 = vld [vmem:[%s274 + $0xb0] sm:$0xff]
      %v305 = vld [vmem:[%s274 + $0xb8] sm:$0xff]
      %v306 = vld [vmem:[%s274 + $0xc0] sm:$0xff]
      %v307 = vld [vmem:[%s274 + $0xc8] sm:$0xff]
      %v308 = vld [vmem:[%s274 + $0xd0] sm:$0xff]
      %v309 = vld [vmem:[%s274 + $0xd8] sm:$0xff]
      %v310 = vld [vmem:[%s274 + $0xe0] sm:$0xff]
      %v311 = vld [vmem:[%s274 + $0xe8] sm:$0xff]
      %v312 = vld [vmem:[%s274 + $0xf0] sm:$0xff]
      %v313 = vld [vmem:[%s274 + $0xf8] sm:$0xff]
      %v314 = vpack.c.bf16 %v283, %v282
      %v315 = vpack.c.bf16 %v285, %v284
      %v316 = vpack.c.bf16 %v287, %v286
      %v317 = vpack.c.bf16 %v289, %v288
      %v318 = vpack.c.bf16 %v291, %v290
      %v319 = vpack.c.bf16 %v293, %v292
      %v320 = vpack.c.bf16 %v295, %v294
      %v321 = vpack.c.bf16 %v297, %v296
      %v322 = vpack.c.bf16 %v299, %v298
      %v323 = vpack.c.bf16 %v301, %v300
      %v324 = vpack.c.bf16 %v303, %v302
      %v325 = vpack.c.bf16 %v305, %v304
      %v326 = vpack.c.bf16 %v307, %v306
      %v327 = vpack.c.bf16 %v309, %v308
      %v328 = vpack.c.bf16 %v311, %v310
      %v329 = vpack.c.bf16 %v313, %v312
      %v330 = vld [vmem:[%s1] sm:$0xf]
      %v331 = vld [vmem:[%s1 + $0x4] sm:$0xf]
      %v332 = vld [vmem:[%s1 + $0x8] sm:$0xf]
      %v333 = vld [vmem:[%s1 + $0xc] sm:$0xf]
      %v334 = vld [vmem:[%s1 + $0x10] sm:$0xf]
      %v335 = vld [vmem:[%s1 + $0x14] sm:$0xf]
      %v336 = vld [vmem:[%s1 + $0x18] sm:$0xf]
      %v337 = vld [vmem:[%s1 + $0x1c] sm:$0xf]
      %v338 = vld [vmem:[%s2] sm:$0x1]
      %v340 = vlaneseq
      %v341 = vshrl.u32 %v340, 7
      %v342 = vsub.s32 0, %v341
      %v343 = vrot.slane %v338, %v342
      %v353 = vunpack.c.l.b16 %v330
      %v354 = vunpack.c.l.b16 %v331
      %v355 = vunpack.c.l.b16 %v332
      %v356 = vunpack.c.l.b16 %v333
      %v357 = vunpack.c.l.b16 %v334
      %v358 = vunpack.c.l.b16 %v335
      %v359 = vunpack.c.l.b16 %v336
      %v360 = vunpack.c.l.b16 %v337
      %v361 = vpack.c.b16 %v354, %v353
      %v362 = vpack.c.b16 %v356, %v355
      %v363 = vpack.c.b16 %v358, %v357
      %v364 = vpack.c.b16 %v360, %v359
      %vm369 = vcmask 523264
      %v371 = vsel %vm369, %v314, 0
      %v374 = vsel %vm369, %v315, 0
      %v377 = vsel %vm369, %v316, 0
      %v380 = vsel %vm369, %v317, 0
      %v383 = vsel %vm369, %v318, 0
      %v386 = vsel %vm369, %v319, 0
      %v389 = vsel %vm369, %v320, 0
      %v392 = vsel %vm369, %v321, 0
      %v395 = vsel %vm369, %v322, 0
      %v398 = vsel %vm369, %v323, 0
      %v401 = vsel %vm369, %v324, 0
      %v404 = vsel %vm369, %v325, 0
      %v407 = vsel %vm369, %v326, 0
      %v410 = vsel %vm369, %v327, 0
      %v413 = vsel %vm369, %v328, 0
      %v416 = vsel %vm369, %v329, 0
      %418 = vmatprep.subr.bf16.mxu0 0
      %419 = vmatpush1.bf16.msra.mxu0 %v361
      %420 = vmatprep.subr.bf16.mxu0 0
      %421 = vmatpush1.bf16.msra.mxu0 %v362
      %422 = vmatprep.subr.bf16.mxu0 0
      %423 = vmatpush1.bf16.msra.mxu0 %v363
      %424 = vmatprep.subr.bf16.mxu0 0
      %425 = vmatpush1.bf16.msra.mxu0 %v364
      %426 = vmatprep.subr.bf16.mxu0 0
      %427 = vmatpush1.bf16.msra.mxu0 0
      %428 = vmatprep.subr.bf16.mxu0 0
      %429 = vmatpush1.bf16.msra.mxu0 0
      %430 = vmatprep.subr.bf16.mxu0 0
      %431 = vmatpush1.bf16.msra.mxu0 0
      %432 = vmatprep.subr.bf16.mxu0 0
      %433 = vmatpush1.bf16.msra.mxu0 0
      %434 = vmatprep.subr.bf16.mxu0 0
      %435 = vmatpush1.bf16.msra.mxu0 0
      %436 = vmatprep.subr.bf16.mxu0 0
      %437 = vmatpush1.bf16.msra.mxu0 0
      %438 = vmatprep.subr.bf16.mxu0 0
      %439 = vmatpush1.bf16.msra.mxu0 0
      %440 = vmatprep.subr.bf16.mxu0 0
      %441 = vmatpush1.bf16.msra.mxu0 0
      %442 = vmatprep.subr.bf16.mxu0 0
      %443 = vmatpush1.bf16.msra.mxu0 0
      %444 = vmatprep.subr.bf16.mxu0 0
      %445 = vmatpush1.bf16.msra.mxu0 0
      %446 = vmatprep.subr.bf16.mxu0 0
      %447 = vmatpush1.bf16.msra.mxu0 0
      %448 = vmatprep.subr.bf16.mxu0 0
      %449 = vmatpush1.bf16.msra.mxu0 0
      %450 = vmatprep.mubr.bf16.mxu0 0
      %451 = vmatmul.mubr.bf16.gmra.mrb[0].mxu0 %v371
      %v452 = vpop.f32.mrb[0].mxu0
      %v453 = vadd.f32 %v343, %v452
      %v454 = vpop.f32.mrb[0].mxu0
      %v455 = vpop.f32.mrb[0].mxu0
      %v456 = vadd.f32 %v343, %v455
      %v457 = vpop.f32.mrb[0].mxu0
      %458 = vmatprep.mubr.bf16.mxu0 0
      %459 = vmatmul.mubr.bf16.gmra.mrb[0].mxu0 %v374
      %v460 = vpop.f32.mrb[0].mxu0
      %v461 = vadd.f32 %v343, %v460
      %v462 = vpop.f32.mrb[0].mxu0
      %v463 = vpop.f32.mrb[0].mxu0
      %v464 = vadd.f32 %v343, %v463
      %v465 = vpop.f32.mrb[0].mxu0
      %466 = vmatprep.mubr.bf16.mxu0 0
      %467 = vmatmul.mubr.bf16.gmra.mrb[0].mxu0 %v377
      %v468 = vpop.f32.mrb[0].mxu0
      %v469 = vadd.f32 %v343, %v468
      %v470 = vpop.f32.mrb[0].mxu0
      %v471 = vpop.f32.mrb[0].mxu0
      %v472 = vadd.f32 %v343, %v471
      %v473 = vpop.f32.mrb[0].mxu0
      %474 = vmatprep.mubr.bf16.mxu0 0
      %475 = vmatmul.mubr.bf16.gmra.mrb[0].mxu0 %v380
      %v476 = vpop.f32.mrb[0].mxu0
      %v477 = vadd.f32 %v343, %v476
      %v478 = vpop.f32.mrb[0].mxu0
      %v479 = vpop.f32.mrb[0].mxu0
      %v480 = vadd.f32 %v343, %v479
      %v481 = vpop.f32.mrb[0].mxu0
      %482 = vmatprep.mubr.bf16.mxu0 0
      %483 = vmatmul.mubr.bf16.gmra.mrb[0].mxu0 %v383
      %v484 = vpop.f32.mrb[0].mxu0
      %v485 = vadd.f32 %v343, %v484
      %v486 = vpop.f32.mrb[0].mxu0
      %v487 = vpop.f32.mrb[0].mxu0
      %v488 = vadd.f32 %v343, %v487
      %v489 = vpop.f32.mrb[0].mxu0
      %490 = vmatprep.mubr.bf16.mxu0 0
      %491 = vmatmul.mubr.bf16.gmra.mrb[0].mxu0 %v386
      %v492 = vpop.f32.mrb[0].mxu0
      %v493 = vadd.f32 %v343, %v492
      %v494 = vpop.f32.mrb[0].mxu0
      %v495 = vpop.f32.mrb[0].mxu0
      %v496 = vadd.f32 %v343, %v495
      %v497 = vpop.f32.mrb[0].mxu0
      %498 = vmatprep.mubr.bf16.mxu0 0
      %499 = vmatmul.mubr.bf16.gmra.mrb[0].mxu0 %v389
      %v500 = vpop.f32.mrb[0].mxu0
      %v501 = vadd.f32 %v343, %v500
      %v502 = vpop.f32.mrb[0].mxu0
      %v503 = vpop.f32.mrb[0].mxu0
      %v504 = vadd.f32 %v343, %v503
      %v505 = vpop.f32.mrb[0].mxu0
      %506 = vmatprep.mubr.bf16.mxu0 0
      %507 = vmatmul.mubr.bf16.gmra.mrb[0].mxu0 %v392
      %v508 = vpop.f32.mrb[0].mxu0
      %v509 = vadd.f32 %v343, %v508
      %v510 = vpop.f32.mrb[0].mxu0
      %v511 = vpop.f32.mrb[0].mxu0
      %v512 = vadd.f32 %v343, %v511
      %v513 = vpop.f32.mrb[0].mxu0
      %514 = vmatprep.mubr.bf16.mxu0 0
      %515 = vmatmul.mubr.bf16.gmra.mrb[0].mxu0 %v395
      %v516 = vpop.f32.mrb[0].mxu0
      %v517 = vadd.f32 %v343, %v516
      %v518 = vpop.f32.mrb[0].mxu0
      %v519 = vpop.f32.mrb[0].mxu0
      %v520 = vadd.f32 %v343, %v519
      %v521 = vpop.f32.mrb[0].mxu0
      %522 = vmatprep.mubr.bf16.mxu0 0
      %523 = vmatmul.mubr.bf16.gmra.mrb[0].mxu0 %v398
      %v524 = vpop.f32.mrb[0].mxu0
      %v525 = vadd.f32 %v343, %v524
      %v526 = vpop.f32.mrb[0].mxu0
      %v527 = vpop.f32.mrb[0].mxu0
      %v528 = vadd.f32 %v343, %v527
      %v529 = vpop.f32.mrb[0].mxu0
      %530 = vmatprep.mubr.bf16.mxu0 0
      %531 = vmatmul.mubr.bf16.gmra.mrb[0].mxu0 %v401
      %v532 = vpop.f32.mrb[0].mxu0
      %v533 = vadd.f32 %v343, %v532
      %v534 = vpop.f32.mrb[0].mxu0
      %v535 = vpop.f32.mrb[0].mxu0
      %v536 = vadd.f32 %v343, %v535
      %v537 = vpop.f32.mrb[0].mxu0
      %538 = vmatprep.mubr.bf16.mxu0 0
      %539 = vmatmul.mubr.bf16.gmra.mrb[0].mxu0 %v404
      %v540 = vpop.f32.mrb[0].mxu0
      %v541 = vadd.f32 %v343, %v540
      %v542 = vpop.f32.mrb[0].mxu0
      %v543 = vpop.f32.mrb[0].mxu0
      %v544 = vadd.f32 %v343, %v543
      %v545 = vpop.f32.mrb[0].mxu0
      %546 = vmatprep.mubr.bf16.mxu0 0
      %547 = vmatmul.mubr.bf16.gmra.mrb[0].mxu0 %v407
      %v548 = vpop.f32.mrb[0].mxu0
      %v549 = vadd.f32 %v343, %v548
      %v550 = vpop.f32.mrb[0].mxu0
      %v551 = vpop.f32.mrb[0].mxu0
      %v552 = vadd.f32 %v343, %v551
      %v553 = vpop.f32.mrb[0].mxu0
      %554 = vmatprep.mubr.bf16.mxu0 0
      %555 = vmatmul.mubr.bf16.gmra.mrb[0].mxu0 %v410
      %v556 = vpop.f32.mrb[0].mxu0
      %v557 = vadd.f32 %v343, %v556
      %v558 = vpop.f32.mrb[0].mxu0
      %v559 = vpop.f32.mrb[0].mxu0
      %v560 = vadd.f32 %v343, %v559
      %v561 = vpop.f32.mrb[0].mxu0
      %562 = vmatprep.mubr.bf16.mxu0 0
      %563 = vmatmul.mubr.bf16.gmra.mrb[0].mxu0 %v413
      %v564 = vpop.f32.mrb[0].mxu0
      %v565 = vadd.f32 %v343, %v564
      %v566 = vpop.f32.mrb[0].mxu0
      %v567 = vpop.f32.mrb[0].mxu0
      %v568 = vadd.f32 %v343, %v567
      %v569 = vpop.f32.mrb[0].mxu0
      %570 = vmatprep.mubr.bf16.mxu0 0
      %571 = vmatmul.mubr.bf16.gmra.mrb[0].mxu0 %v416
      %v572 = vpop.f32.mrb[0].mxu0
      %v573 = vadd.f32 %v343, %v572
      %v574 = vpop.f32.mrb[0].mxu0
      %v575 = vpop.f32.mrb[0].mxu0
      %v576 = vadd.f32 %v343, %v575
      %v577 = vpop.f32.mrb[0].mxu0
      %578 = vdwg.mxu0
      %v579 = vmax.f32 %v453, 0.0
      %v580 = vmax.f32 %v456, 0.0
      %v581 = vmax.f32 %v461, 0.0
      %v582 = vmax.f32 %v464, 0.0
      %v583 = vmax.f32 %v469, 0.0
      %v584 = vmax.f32 %v472, 0.0
      %v585 = vmax.f32 %v477, 0.0
      %v586 = vmax.f32 %v480, 0.0
      %v587 = vmax.f32 %v485, 0.0
      %v588 = vmax.f32 %v488, 0.0
      %v589 = vmax.f32 %v493, 0.0
      %v590 = vmax.f32 %v496, 0.0
      %v591 = vmax.f32 %v501, 0.0
      %v592 = vmax.f32 %v504, 0.0
      %v593 = vmax.f32 %v509, 0.0
      %v594 = vmax.f32 %v512, 0.0
      %v595 = vmax.f32 %v517, 0.0
      %v596 = vmax.f32 %v520, 0.0
      %v597 = vmax.f32 %v525, 0.0
      %v598 = vmax.f32 %v528, 0.0
      %v599 = vmax.f32 %v533, 0.0
      %v600 = vmax.f32 %v536, 0.0
      %v601 = vmax.f32 %v541, 0.0
      %v602 = vmax.f32 %v544, 0.0
      %v603 = vmax.f32 %v549, 0.0
      %v604 = vmax.f32 %v552, 0.0
      %v605 = vmax.f32 %v557, 0.0
      %v606 = vmax.f32 %v560, 0.0
      %v607 = vmax.f32 %v565, 0.0
      %v608 = vmax.f32 %v568, 0.0
      %v609 = vmax.f32 %v573, 0.0
      %v610 = vmax.f32 %v576, 0.0
      %v611 = vpack.c.bf16 %v580, %v579
      %v612 = vpack.c.bf16 %v582, %v581
      %v613 = vpack.c.bf16 %v584, %v583
      %v614 = vpack.c.bf16 %v586, %v585
      %v615 = vpack.c.bf16 %v588, %v587
      %v616 = vpack.c.bf16 %v590, %v589
      %v617 = vpack.c.bf16 %v592, %v591
      %v618 = vpack.c.bf16 %v594, %v593
      %v619 = vpack.c.bf16 %v596, %v595
      %v620 = vpack.c.bf16 %v598, %v597
      %v621 = vpack.c.bf16 %v600, %v599
      %v622 = vpack.c.bf16 %v602, %v601
      %v623 = vpack.c.bf16 %v604, %v603
      %v624 = vpack.c.bf16 %v606, %v605
      %v625 = vpack.c.bf16 %v608, %v607
      %v626 = vpack.c.bf16 %v610, %v609
      %v627 = vld [vmem:[%s3] sm:$0xf]
      %v628 = vld [vmem:[%s3 + $0x4] sm:$0xf]
      %v629 = vld [vmem:[%s3 + $0x8] sm:$0xf]
      %v630 = vld [vmem:[%s3 + $0xc] sm:$0xf]
      %v631 = vld [vmem:[%s3 + $0x10] sm:$0xf]
      %v632 = vld [vmem:[%s3 + $0x14] sm:$0xf]
      %v633 = vld [vmem:[%s3 + $0x18] sm:$0xf]
      %v634 = vld [vmem:[%s3 + $0x1c] sm:$0xf]
      %v635 = vld [vmem:[%s3 + $0x20] sm:$0xf]
      %v636 = vld [vmem:[%s3 + $0x24] sm:$0xf]
      %v637 = vld [vmem:[%s3 + $0x28] sm:$0xf]
      %v638 = vld [vmem:[%s3 + $0x2c] sm:$0xf]
      %v639 = vld [vmem:[%s3 + $0x30] sm:$0xf]
      %v640 = vld [vmem:[%s3 + $0x34] sm:$0xf]
      %v641 = vld [vmem:[%s3 + $0x38] sm:$0xf]
      %v642 = vld [vmem:[%s3 + $0x3c] sm:$0xf]
      %v643 = vld [vmem:[%s4] sm:$0x1]
      %v645 = vlaneseq
      %v646 = vshrl.u32 %v645, 7
      %v647 = vsub.s32 0, %v646
      %v648 = vrot.slane %v643, %v647
      %v666 = vunpack.c.l.b16 %v627
      %v667 = vunpack.c.l.b16 %v628
      %v668 = vunpack.c.l.b16 %v629
      %v669 = vunpack.c.l.b16 %v630
      %v670 = vunpack.c.l.b16 %v631
      %v671 = vunpack.c.l.b16 %v632
      %v672 = vunpack.c.l.b16 %v633
      %v673 = vunpack.c.l.b16 %v634
      %v674 = vunpack.c.l.b16 %v635
      %v675 = vunpack.c.l.b16 %v636
      %v676 = vunpack.c.l.b16 %v637
      %v677 = vunpack.c.l.b16 %v638
      %v678 = vunpack.c.l.b16 %v639
      %v679 = vunpack.c.l.b16 %v640
      %v680 = vunpack.c.l.b16 %v641
      %v681 = vunpack.c.l.b16 %v642
      %v682 = vpack.c.b16 %v667, %v666
      %v683 = vpack.c.b16 %v669, %v668
      %v684 = vpack.c.b16 %v671, %v670
      %v685 = vpack.c.b16 %v673, %v672
      %v686 = vpack.c.b16 %v675, %v674
      %v687 = vpack.c.b16 %v677, %v676
      %v688 = vpack.c.b16 %v679, %v678
      %v689 = vpack.c.b16 %v681, %v680
      %698 = vmatprep.subr.bf16.mxu0 0
      %699 = vmatpush1.bf16.msra.mxu0 %v682
      %700 = vmatprep.subr.bf16.mxu0 0
      %701 = vmatpush1.bf16.msra.mxu0 %v683
      %702 = vmatprep.subr.bf16.mxu0 0
      %703 = vmatpush1.bf16.msra.mxu0 %v684
      %704 = vmatprep.subr.bf16.mxu0 0
      %705 = vmatpush1.bf16.msra.mxu0 %v685
      %706 = vmatprep.subr.bf16.mxu0 0
      %707 = vmatpush1.bf16.msra.mxu0 %v686
      %708 = vmatprep.subr.bf16.mxu0 0
      %709 = vmatpush1.bf16.msra.mxu0 %v687
      %710 = vmatprep.subr.bf16.mxu0 0
      %711 = vmatpush1.bf16.msra.mxu0 %v688
      %712 = vmatprep.subr.bf16.mxu0 0
      %713 = vmatpush1.bf16.msra.mxu0 %v689
      %714 = vmatprep.subr.bf16.mxu0 0
      %715 = vmatpush1.bf16.msra.mxu0 0
      %716 = vmatprep.subr.bf16.mxu0 0
      %717 = vmatpush1.bf16.msra.mxu0 0
      %718 = vmatprep.subr.bf16.mxu0 0
      %719 = vmatpush1.bf16.msra.mxu0 0
      %720 = vmatprep.subr.bf16.mxu0 0
      %721 = vmatpush1.bf16.msra.mxu0 0
      %722 = vmatprep.subr.bf16.mxu0 0
      %723 = vmatpush1.bf16.msra.mxu0 0
      %724 = vmatprep.subr.bf16.mxu0 0
      %725 = vmatpush1.bf16.msra.mxu0 0
      %726 = vmatprep.subr.bf16.mxu0 0
      %727 = vmatpush1.bf16.msra.mxu0 0
      %728 = vmatprep.subr.bf16.mxu0 0
      %729 = vmatpush1.bf16.msra.mxu0 0
      %730 = vmatprep.mubr.bf16.mxu0 0
      %731 = vmatmul.mubr.bf16.gmra.mrb[0].mxu0 %v611
      %v732 = vpop.f32.mrb[0].mxu0
      %v733 = vadd.f32 %v648, %v732
      %v734 = vpop.f32.mrb[0].mxu0
      %v735 = vpop.f32.mrb[0].mxu0
      %v736 = vadd.f32 %v648, %v735
      %v737 = vpop.f32.mrb[0].mxu0
      %738 = vmatprep.mubr.bf16.mxu0 0
      %739 = vmatmul.mubr.bf16.gmra.mrb[0].mxu0 %v612
      %v740 = vpop.f32.mrb[0].mxu0
      %v741 = vadd.f32 %v648, %v740
      %v742 = vpop.f32.mrb[0].mxu0
      %v743 = vpop.f32.mrb[0].mxu0
      %v744 = vadd.f32 %v648, %v743
      %v745 = vpop.f32.mrb[0].mxu0
      %746 = vmatprep.mubr.bf16.mxu0 0
      %747 = vmatmul.mubr.bf16.gmra.mrb[0].mxu0 %v613
      %v748 = vpop.f32.mrb[0].mxu0
      %v749 = vadd.f32 %v648, %v748
      %v750 = vpop.f32.mrb[0].mxu0
      %v751 = vpop.f32.mrb[0].mxu0
      %v752 = vadd.f32 %v648, %v751
      %v753 = vpop.f32.mrb[0].mxu0
      %754 = vmatprep.mubr.bf16.mxu0 0
      %755 = vmatmul.mubr.bf16.gmra.mrb[0].mxu0 %v614
      %v756 = vpop.f32.mrb[0].mxu0
      %v757 = vadd.f32 %v648, %v756
      %v758 = vpop.f32.mrb[0].mxu0
      %v759 = vpop.f32.mrb[0].mxu0
      %v760 = vadd.f32 %v648, %v759
      %v761 = vpop.f32.mrb[0].mxu0
      %762 = vmatprep.mubr.bf16.mxu0 0
      %763 = vmatmul.mubr.bf16.gmra.mrb[0].mxu0 %v615
      %v764 = vpop.f32.mrb[0].mxu0
      %v765 = vadd.f32 %v648, %v764
      %v766 = vpop.f32.mrb[0].mxu0
      %v767 = vpop.f32.mrb[0].mxu0
      %v768 = vadd.f32 %v648, %v767
      %v769 = vpop.f32.mrb[0].mxu0
      %770 = vmatprep.mubr.bf16.mxu0 0
      %771 = vmatmul.mubr.bf16.gmra.mrb[0].mxu0 %v616
      %v772 = vpop.f32.mrb[0].mxu0
      %v773 = vadd.f32 %v648, %v772
      %v774 = vpop.f32.mrb[0].mxu0
      %v775 = vpop.f32.mrb[0].mxu0
      %v776 = vadd.f32 %v648, %v775
      %v777 = vpop.f32.mrb[0].mxu0
      %778 = vmatprep.mubr.bf16.mxu0 0
      %779 = vmatmul.mubr.bf16.gmra.mrb[0].mxu0 %v617
      %v780 = vpop.f32.mrb[0].mxu0
      %v781 = vadd.f32 %v648, %v780
      %v782 = vpop.f32.mrb[0].mxu0
      %v783 = vpop.f32.mrb[0].mxu0
      %v784 = vadd.f32 %v648, %v783
      %v785 = vpop.f32.mrb[0].mxu0
      %786 = vmatprep.mubr.bf16.mxu0 0
      %787 = vmatmul.mubr.bf16.gmra.mrb[0].mxu0 %v618
      %v788 = vpop.f32.mrb[0].mxu0
      %v789 = vadd.f32 %v648, %v788
      %v790 = vpop.f32.mrb[0].mxu0
      %v791 = vpop.f32.mrb[0].mxu0
      %v792 = vadd.f32 %v648, %v791
      %v793 = vpop.f32.mrb[0].mxu0
      %794 = vmatprep.mubr.bf16.mxu0 0
      %795 = vmatmul.mubr.bf16.gmra.mrb[0].mxu0 %v619
      %v796 = vpop.f32.mrb[0].mxu0
      %v797 = vadd.f32 %v648, %v796
      %v798 = vpop.f32.mrb[0].mxu0
      %v799 = vpop.f32.mrb[0].mxu0
      %v800 = vadd.f32 %v648, %v799
      %v801 = vpop.f32.mrb[0].mxu0
      %802 = vmatprep.mubr.bf16.mxu0 0
      %803 = vmatmul.mubr.bf16.gmra.mrb[0].mxu0 %v620
      %v804 = vpop.f32.mrb[0].mxu0
      %v805 = vadd.f32 %v648, %v804
      %v806 = vpop.f32.mrb[0].mxu0
      %v807 = vpop.f32.mrb[0].mxu0
      %v808 = vadd.f32 %v648, %v807
      %v809 = vpop.f32.mrb[0].mxu0
      %810 = vmatprep.mubr.bf16.mxu0 0
      %811 = vmatmul.mubr.bf16.gmra.mrb[0].mxu0 %v621
      %v812 = vpop.f32.mrb[0].mxu0
      %v813 = vadd.f32 %v648, %v812
      %v814 = vpop.f32.mrb[0].mxu0
      %v815 = vpop.f32.mrb[0].mxu0
      %v816 = vadd.f32 %v648, %v815
      %v817 = vpop.f32.mrb[0].mxu0
      %818 = vmatprep.mubr.bf16.mxu0 0
      %819 = vmatmul.mubr.bf16.gmra.mrb[0].mxu0 %v622
      %v820 = vpop.f32.mrb[0].mxu0
      %v821 = vadd.f32 %v648, %v820
      %v822 = vpop.f32.mrb[0].mxu0
      %v823 = vpop.f32.mrb[0].mxu0
      %v824 = vadd.f32 %v648, %v823
      %v825 = vpop.f32.mrb[0].mxu0
      %826 = vmatprep.mubr.bf16.mxu0 0
      %827 = vmatmul.mubr.bf16.gmra.mrb[0].mxu0 %v623
      %v828 = vpop.f32.mrb[0].mxu0
      %v829 = vadd.f32 %v648, %v828
      %v830 = vpop.f32.mrb[0].mxu0
      %v831 = vpop.f32.mrb[0].mxu0
      %v832 = vadd.f32 %v648, %v831
      %v833 = vpop.f32.mrb[0].mxu0
      %834 = vmatprep.mubr.bf16.mxu0 0
      %835 = vmatmul.mubr.bf16.gmra.mrb[0].mxu0 %v624
      %v836 = vpop.f32.mrb[0].mxu0
      %v837 = vadd.f32 %v648, %v836
      %v838 = vpop.f32.mrb[0].mxu0
      %v839 = vpop.f32.mrb[0].mxu0
      %v840 = vadd.f32 %v648, %v839
      %v841 = vpop.f32.mrb[0].mxu0
      %842 = vmatprep.mubr.bf16.mxu0 0
      %843 = vmatmul.mubr.bf16.gmra.mrb[0].mxu0 %v625
      %v844 = vpop.f32.mrb[0].mxu0
      %v845 = vadd.f32 %v648, %v844
      %v846 = vpop.f32.mrb[0].mxu0
      %v847 = vpop.f32.mrb[0].mxu0
      %v848 = vadd.f32 %v648, %v847
      %v849 = vpop.f32.mrb[0].mxu0
      %850 = vmatprep.mubr.bf16.mxu0 0
      %851 = vmatmul.mubr.bf16.gmra.mrb[0].mxu0 %v626
      %v852 = vpop.f32.mrb[0].mxu0
      %v853 = vadd.f32 %v648, %v852
      %v854 = vpop.f32.mrb[0].mxu0
      %v855 = vpop.f32.mrb[0].mxu0
      %v856 = vadd.f32 %v648, %v855
      %v857 = vpop.f32.mrb[0].mxu0
      %858 = vdwg.mxu0
      %v859 = vmax.f32 %v733, 0.0
      %v860 = vmax.f32 %v736, 0.0
      %v861 = vmax.f32 %v741, 0.0
      %v862 = vmax.f32 %v744, 0.0
      %v863 = vmax.f32 %v749, 0.0
      %v864 = vmax.f32 %v752, 0.0
      %v865 = vmax.f32 %v757, 0.0
      %v866 = vmax.f32 %v760, 0.0
      %v867 = vmax.f32 %v765, 0.0
      %v868 = vmax.f32 %v768, 0.0
      %v869 = vmax.f32 %v773, 0.0
      %v870 = vmax.f32 %v776, 0.0
      %v871 = vmax.f32 %v781, 0.0
      %v872 = vmax.f32 %v784, 0.0
      %v873 = vmax.f32 %v789, 0.0
      %v874 = vmax.f32 %v792, 0.0
      %v875 = vmax.f32 %v797, 0.0
      %v876 = vmax.f32 %v800, 0.0
      %v877 = vmax.f32 %v805, 0.0
      %v878 = vmax.f32 %v808, 0.0
      %v879 = vmax.f32 %v813, 0.0
      %v880 = vmax.f32 %v816, 0.0
      %v881 = vmax.f32 %v821, 0.0
      %v882 = vmax.f32 %v824, 0.0
      %v883 = vmax.f32 %v829, 0.0
      %v884 = vmax.f32 %v832, 0.0
      %v885 = vmax.f32 %v837, 0.0
      %v886 = vmax.f32 %v840, 0.0
      %v887 = vmax.f32 %v845, 0.0
      %v888 = vmax.f32 %v848, 0.0
      %v889 = vmax.f32 %v853, 0.0
      %v890 = vmax.f32 %v856, 0.0
      %v891 = vld [vmem:[%s5] sm:$0xf]
      %v892 = vld [vmem:[%s5 + $0x4] sm:$0xf]
      %v893 = vpack.c.bf16 %v860, %v859
      %v894 = vpack.c.bf16 %v862, %v861
      %v895 = vpack.c.bf16 %v864, %v863
      %v896 = vpack.c.bf16 %v866, %v865
      %v897 = vpack.c.bf16 %v868, %v867
      %v898 = vpack.c.bf16 %v870, %v869
      %v899 = vpack.c.bf16 %v872, %v871
      %v900 = vpack.c.bf16 %v874, %v873
      %v901 = vpack.c.bf16 %v876, %v875
      %v902 = vpack.c.bf16 %v878, %v877
      %v903 = vpack.c.bf16 %v880, %v879
      %v904 = vpack.c.bf16 %v882, %v881
      %v905 = vpack.c.bf16 %v884, %v883
      %v906 = vpack.c.bf16 %v886, %v885
      %v907 = vpack.c.bf16 %v888, %v887
      %v908 = vpack.c.bf16 %v890, %v889
      %v911 = vunpack.c.l.b16 %v891
      %v912 = vunpack.c.l.b16 %v892
      %v913 = vpack.c.b16 %v912, %v911
      %v915 = vsel %vm369, %v913, 0
      %v918 = vsel %vm369, %v893, 0
      %v921 = vsel %vm369, %v894, 0
      %v924 = vsel %vm369, %v895, 0
      %v927 = vsel %vm369, %v896, 0
      %v930 = vsel %vm369, %v897, 0
      %v933 = vsel %vm369, %v898, 0
      %v936 = vsel %vm369, %v899, 0
      %v939 = vsel %vm369, %v900, 0
      %v942 = vsel %vm369, %v901, 0
      %v945 = vsel %vm369, %v902, 0
      %v948 = vsel %vm369, %v903, 0
      %v951 = vsel %vm369, %v904, 0
      %v954 = vsel %vm369, %v905, 0
      %v957 = vsel %vm369, %v906, 0
      %v960 = vsel %vm369, %v907, 0
      %v963 = vsel %vm369, %v908, 0
      %965 = vmatprep.subr.bf16.mxu0 0
      %966 = vmatpush1.bf16.xpose.msra.mxu0 %v918
      %967 = vmatprep.subr.bf16.mxu0 0
      %968 = vmatpush1.bf16.xpose.msra.mxu0 %v921
      %969 = vmatprep.subr.bf16.mxu0 0
      %970 = vmatpush1.bf16.xpose.msra.mxu0 %v924
      %971 = vmatprep.subr.bf16.mxu0 0
      %972 = vmatpush1.bf16.xpose.msra.mxu0 %v927
      %973 = vmatprep.subr.bf16.mxu0 0
      %974 = vmatpush1.bf16.xpose.msra.mxu0 %v930
      %975 = vmatprep.subr.bf16.mxu0 0
      %976 = vmatpush1.bf16.xpose.msra.mxu0 %v933
      %977 = vmatprep.subr.bf16.mxu0 0
      %978 = vmatpush1.bf16.xpose.msra.mxu0 %v936
      %979 = vmatprep.subr.bf16.mxu0 0
      %980 = vmatpush1.bf16.xpose.msra.mxu0 %v939
      %981 = vmatprep.subr.bf16.mxu0 0
      %982 = vmatpush1.bf16.xpose.msra.mxu0 %v942
      %983 = vmatprep.subr.bf16.mxu0 0
      %984 = vmatpush1.bf16.xpose.msra.mxu0 %v945
      %985 = vmatprep.subr.bf16.mxu0 0
      %986 = vmatpush1.bf16.xpose.msra.mxu0 %v948
      %987 = vmatprep.subr.bf16.mxu0 0
      %988 = vmatpush1.bf16.xpose.msra.mxu0 %v951
      %989 = vmatprep.subr.bf16.mxu0 0
      %990 = vmatpush1.bf16.xpose.msra.mxu0 %v954
      %991 = vmatprep.subr.bf16.mxu0 0
      %992 = vmatpush1.bf16.xpose.msra.mxu0 %v957
      %993 = vmatprep.subr.bf16.mxu0 0
      %994 = vmatpush1.bf16.xpose.msra.mxu0 %v960
      %995 = vmatprep.subr.bf16.mxu0 0
      %996 = vmatpush1.bf16.xpose.msra.mxu0 %v963
      %997 = vmatprep.mubr.bf16.mxu0 0
      %998 = vmatmul.mubr.bf16.gmra.mrb[0].mxu0 %v915
      %v999 = vpop.f32.mrb[0].mxu0
      %v1000 = vadd.f32 0.0, %v999
      %v1001 = vpop.f32.mrb[0].mxu0
      %v1002 = vadd.f32 0.0, %v1001
      %v1003 = vpop.f32.mrb[0].mxu0
      %v1004 = vpop.f32.mrb[0].mxu0
      %1005 = vdwg.mxu0
      %s1006 = sld [smem:[#allocation2]]
      %v1007 = vstv %s1006
      %v1008 = vadd.f32 %v1000, %v1007
      %v1009 = vadd.f32 %v1002, %v1007
      %v1012 = vcombine.low %v1008, %v1009
      %v1014 = vunpack.c.l.s4 1966171168
      %v1015 = vunpack.c.0.s8 %v1014
      %v1016 = vlaneseq
      %v1017 = vshrl.u32 %v1016, 7
      %v1018 = vsub.s32 %v1015, %v1017
      %v1019 = vrot.slane %v1012, %v1018
      %v1021 = vunpack.c.l.s4 1966171168
      %v1022 = vunpack.c.0.s8 %v1021
      %v1023 = vlaneseq
      %v1024 = vshrl.u32 %v1023, 7
      %v1025 = vsub.s32 %v1022, %v1024
      %v1026 = vrot.slane %v1019, %v1025
      %v1028 = vlaneseq
      %vm1029 = vcmp.ge.s32.totalorder %v1028, 0
      %vm1030 = vcmp.lt.s32.totalorder %v1028, 256
      %vm1031 = vmand %vm1029, %vm1030
      %1032 = vst.msk [vmem:[%s279] sm:$0x3] %vm1031, %v1026
      %s1033 = smul.u32 2, %s19
      %p1034 = scmp.lt.s32.totalorder %s1033, 3
      %s1035 = scalar_select %p1034, %s1033, 3
      %s1036 = scalar_lea.vmem %s7, %s1035
      // Predicated region
      $region49: #{qnet_forward.1} parent=47 // pred_check
        %p1037 = pneg %p189
      $region50: #{qnet_forward.1} parent=47 // pred_check_branch
        %1039 = sbr.rel (%p1037) target = $region52
      $region51: #{qnet_forward.1} parent=47 // pred_region
        %s1040 = smul.u32 2, %s19
      $region52: #{qnet_forward.1} parent=47 // pred_fallthru
        _
    $region48: #{qnet_forward.1} parent=5 // pred_fallthru
      _
    %p1041 = scmp.le.s32.totalorder 2, %s14
    // Predicated region
    $region53: #{qnet_forward.1} parent=5 // pred_check
      %p1042 = pneg %p1041
    $region54: #{qnet_forward.1} parent=5 // pred_check_branch
      %1044 = sbr.rel (%p1042) target = $region56
    $region55: #{qnet_forward.1} parent=5 // pred_region
      %s1045 = ssub.s32 %s14, 2
      // Predicated region
      $region57: #{qnet_forward.1} parent=55 // pred_check
        %p1046 = pneg %p195
      $region58: #{qnet_forward.1} parent=55 // pred_check_branch
        %1048 = sbr.rel (%p1046) target = $region60
      $region59: #{qnet_forward.1} parent=55 // pred_region
        %s1049 = smul.u32 2, %s20
        %p1050 = scmp.lt.s32.totalorder %s1049, 3
        %s1051 = scalar_select %p1050, %s1049, 3
        %s1052 = scalar_lea.vmem %s7, %s1051
      $region60: #{qnet_forward.1} parent=55 // pred_fallthru
        _
    $region56: #{qnet_forward.1} parent=5 // pred_fallthru
      _
  $region6: #{qnet_forward.1} parent=0 // loop_footer
    %s18 = sadd.s32 1, %s14
  $region7: #{qnet_forward.1} parent=0 // loop_footer_branch
    %13 = sbr.rel target = $region3
  $region8: #{qnet_forward.1} parent=0 // loop_exit
    _

</llo_original>
